<compile_context>
chip_gen: v5e
topology: v5e:2x2
jax: 0.10.0
libtpu: 0.0.40
codegen_flags: <defaults>
</compile_context>

<pallas_src>
import functools
import numpy as np
import jax
import jax.numpy as jnp
from jax.experimental import pallas as pl
from jax.experimental.pallas import tpu as pltpu


# ----------------------------- fused stack kernel -----------------------------
def encoder_stack_kernel(x_ref, mask_ref, wqkv_ref, wo_ref, w1_ref, w2_ref,
                         vec_ref, out_ref, *, n_heads):
    l = pl.program_id(1)

    # Layer 0 of each batch element: seed the resident activation (held in the
    # output block, whose block index is invariant across the layer axis).
    @pl.when(l == 0)
    def _seed_activation():
        out_ref[...] = x_ref[...]

    x = out_ref[0]                          # (S, D) f32 — input to this layer
    S, D = x.shape
    H = n_heads
    dk = D // H
    mm_dtype = wqkv_ref.dtype               # MXU matmul dtype (bf16)

    # packed per-layer vectors, rows (padded to 4D lanes):
    #   [bo, b2, g1, be1, g2, be2, b1(4D), bqkv(3D, 1/sqrt(dk) folded into bq)]
    vecs = vec_ref[0]                       # (8, 4D) f32
    bo, b2 = vecs[0:1, :D], vecs[1:2, :D]
    g1, be1 = vecs[2:3, :D], vecs[3:4, :D]
    g2, be2 = vecs[4:5, :D], vecs[5:6, :D]
    b1 = vecs[6:7, :]                       # (1, 4D)
    bqkv = vecs[7:8, :3 * D]                # (1, 3D)

    def layer_norm(z, gamma, beta, eps=1e-5):
        inv_d = 1.0 / D
        s1 = jnp.sum(z, axis=-1, keepdims=True)
        s2 = jnp.sum(z * z, axis=-1, keepdims=True)
        mu = s1 * inv_d
        var = jnp.maximum(s2 * inv_d - mu * mu, 0.0)   # guard cancellation
        return (z - mu) * jax.lax.rsqrt(var + eps) * gamma + beta

    x_mm = x.astype(mm_dtype)

    # ---------- fused QKV: one (S,D)@(D,3D) MXU matmul, f32 accumulation ------
    qkv = jnp.dot(x_mm, wqkv_ref[0],
                  preferred_element_type=jnp.float32) + bqkv        # (S, 3D)

    # ---------- head split: static layout shuffle only (no per-head matmuls) --
    def split_heads(t2):                    # (S, D) f32 -> (H, S, dk) bf16
        t2 = t2.astype(mm_dtype)
        return jnp.stack([t2[:, h * dk:(h + 1) * dk] for h in range(H)], axis=0)

    qh = split_heads(qkv[:, 0:D])           # 1/sqrt(dk) already folded in
    kh = split_heads(qkv[:, D:2 * D])
    vh = split_heads(qkv[:, 2 * D:3 * D])

    # ---------- attention scores: heads batched on the leading axis -----------
    scores = jax.lax.dot_general(
        qh, kh, dimension_numbers=(((2,), (2,)), ((0,), (0,))),
        preferred_element_type=jnp.float32)                          # (H, S, S)

    # additive key bias: 0 for valid keys, -1e9 for masked (lane-broadcast add)
    kbias = (mask_ref[0] - 1.0) * 1e9                                # (1, S)
    scores = scores + kbias[None]

    m = jnp.max(scores, axis=-1, keepdims=True)
    e = jnp.exp(scores - m)                                          # f32 (v5e-safe)
    denom = jnp.sum(e, axis=-1, keepdims=True)                       # (H, S, 1)

    # deferred softmax normalization: matmul with e, normalize the small context
    ctx = jax.lax.dot_general(
        e.astype(mm_dtype), vh,
        dimension_numbers=(((2,), (1,)), ((0,), (0,))),
        preferred_element_type=jnp.float32)                          # (H, S, dk)
    ctx = ctx * pl.reciprocal(denom, approx=True)                    # EUP slot

    # ---------- head merge + single full-depth (D,D) output projection --------
    ctx2 = jnp.concatenate([ctx[h] for h in range(H)], axis=-1)      # (S, D)
    attn_out = jnp.dot(ctx2.astype(mm_dtype), wo_ref[0],
                       preferred_element_type=jnp.float32) + bo      # (S, D)

    # ---------- residual + LN1 (dropout = identity) ----------------------------
    ln1 = layer_norm(x + attn_out, g1, be1)

    # ---------- FFN: Linear(D,4D) -> ReLU -> Linear(4D,D) ---------------------
    h1 = jnp.dot(ln1.astype(mm_dtype), w1_ref[0],
                 preferred_element_type=jnp.float32) + b1
    h1 = jnp.maximum(h1, 0.0)
    ffn = jnp.dot(h1.astype(mm_dtype), w2_ref[0],
                  preferred_element_type=jnp.float32) + b2

    # ---------- residual with the ORIGINAL layer input + LN2 ------------------
    out_ref[0] = layer_norm(ffn + x, g2, be2)


# -------------------------- host-side weight packing --------------------------
def stack_layer_params(all_layer_params, n_heads, matmul_dtype=jnp.bfloat16):
    wqkv_l, wo_l, w1_l, w2_l, vec_l = [], [], [], [], []
    for p in all_layer_params:
        (wq, bq, wk, bk, wv, bv, wo, bo, w1, b1, w2, b2, g1, be1, g2, be2) = p
        D = wq.shape[0]
        dk = D // n_heads
        scale = 1.0 / float(np.sqrt(dk))

        # fused (D, 3D) QKV weight; 1/sqrt(dk) pre-folded into the Q columns
        wqkv = jnp.concatenate([wq * scale, wk, wv], axis=1)         # (D, 3D)
        bqkv = jnp.concatenate([bq * scale, bk, bv], axis=1)         # (1, 3D)

        width = 4 * D

        def pad_row(v, _w=width):
            return jnp.pad(v, ((0, 0), (0, _w - v.shape[-1])))

        vec = jnp.concatenate(
            [pad_row(bo), pad_row(b2), pad_row(g1), pad_row(be1),
             pad_row(g2), pad_row(be2), b1, pad_row(bqkv)], axis=0)  # (8, 4D)

        wqkv_l.append(wqkv.astype(matmul_dtype))
        wo_l.append(wo.astype(matmul_dtype))
        w1_l.append(w1.astype(matmul_dtype))
        w2_l.append(w2.astype(matmul_dtype))
        vec_l.append(vec.astype(jnp.float32))
    return (jnp.stack(wqkv_l), jnp.stack(wo_l), jnp.stack(w1_l),
            jnp.stack(w2_l), jnp.stack(vec_l))


# --------------------------------- wrapper ------------------------------------
def encoder_pallas(x, mask, all_layer_params, n_heads, matmul_dtype=jnp.bfloat16):
    B, S, D = x.shape
    L = len(all_layer_params)
    H = n_heads

    wqkv, wo, w1, w2, vecs = stack_layer_params(all_layer_params, n_heads,
                                                matmul_dtype)

    def batch_spec(arr):
        n = arr.ndim - 1
        return pl.BlockSpec((1,) + arr.shape[1:],
                            lambda b, l, _n=n: (b,) + (0,) * _n)

    def layer_spec(arr):
        n = arr.ndim - 1
        return pl.BlockSpec((1,) + arr.shape[1:],
                            lambda b, l, _n=n: (l,) + (0,) * _n)

    in_specs = [
        batch_spec(x),
        batch_spec(mask),
        layer_spec(wqkv),
        layer_spec(wo),
        layer_spec(w1),
        layer_spec(w2),
        layer_spec(vecs),
    ]
    out_spec = pl.BlockSpec((1, S, D), lambda b, l: (b, 0, 0))

    # Explicit VMEM budget: double-buffered input blocks + resident output block
    # + live intermediates, clamped to the physical capacity of the chip
    # (v7x has only 64 MiB per TC; v5e/v6e have 128 MiB).
    def blk_bytes(a):
        return int(np.prod(a.shape[1:])) * a.dtype.itemsize
    block_bytes = sum(blk_bytes(a) for a in (x, mask, wqkv, wo, w1, w2, vecs))
    block_bytes += S * D * 4                                 # resident output block
    inter_bytes = 4 * (2 * H * S * S + S * 3 * D + S * 4 * D + 4 * S * D)
    want = 2 * block_bytes + 2 * inter_bytes + (4 << 20)

    vmem_cap = 64 << 20                                      # conservative default
    try:
        info = pltpu.get_tpu_info()
        vmem_cap = int(getattr(info, "vmem_capacity_bytes", vmem_cap) or vmem_cap)
    except Exception:
        pass
    vmem_limit = int(min(max(32 << 20, want), int(vmem_cap * 0.9)))

    kernel = functools.partial(encoder_stack_kernel, n_heads=n_heads)
    return pl.pallas_call(
        kernel,
        out_shape=jax.ShapeDtypeStruct((B, S, D), jnp.float32),
        grid=(B, L),
        in_specs=in_specs,
        out_specs=out_spec,
        compiler_params=pltpu.CompilerParams(
            dimension_semantics=("parallel", "arbitrary"),
            vmem_limit_bytes=vmem_limit),
    )(x, mask, wqkv, wo, w1, w2, vecs)


# ----------------- pure-JAX reference (for correctness check) -----------------
def encoder_layer_ref(x, mask, p, n_heads):
    (wq, bq, wk, bk, wv, bv, wo, bo, w1, b1, w2, b2, g1, be1, g2, be2) = p
    B, S, D = x.shape
    dk = D // n_heads
    q = x @ wq + bq
    k = x @ wk + bk
    v = x @ wv + bv
    q = q.reshape(B, S, n_heads, dk).transpose(0, 2, 1, 3)
    k = k.reshape(B, S, n_heads, dk).transpose(0, 2, 1, 3)
    v = v.reshape(B, S, n_heads, dk).transpose(0, 2, 1, 3)
    scores = jnp.einsum("bhqd,bhkd->bhqk", q, k) / jnp.sqrt(jnp.float32(dk))
    scores = jnp.where(mask[:, None, :, :] > 0.0, scores, -1e9)
    p_att = jax.nn.softmax(scores, axis=-1)
    ctx = jnp.einsum("bhqk,bhkd->bhqd", p_att, v)
    ctx = ctx.transpose(0, 2, 1, 3).reshape(B, S, D)
    attn_out = ctx @ wo + bo

    def ln(z, g, b):
        mu = jnp.mean(z, axis=-1, keepdims=True)
        var = jnp.mean((z - mu) ** 2, axis=-1, keepdims=True)
        return (z - mu) * jax.lax.rsqrt(var + 1e-5) * g + b

    r1 = ln(x + attn_out, g1, be1)
    ffn = jnp.maximum(r1 @ w1 + b1, 0.0) @ w2 + b2
    return ln(ffn + x, g2, be2)


def encoder_ref(x, mask, all_layer_params, n_heads):
    for p in all_layer_params:
        x = encoder_layer_ref(x, mask, p, n_heads)
    return x


# --------------------------- parameter initialization --------------------------
def init_layer_params(key, d_model):
    ks = jax.random.split(key, 6)
    s = 0.05
    wq = jax.random.normal(ks[0], (d_model, d_model), jnp.float32) * s
    wk = jax.random.normal(ks[1], (d_model, d_model), jnp.float32) * s
    wv = jax.random.normal(ks[2], (d_model, d_model), jnp.float32) * s
    wo = jax.random.normal(ks[3], (d_model, d_model), jnp.float32) * s
    w1 = jax.random.normal(ks[4], (d_model, 4 * d_model), jnp.float32) * s
    w2 = jax.random.normal(ks[5], (4 * d_model, d_model), jnp.float32) * s
    bq = jnp.zeros((1, d_model), jnp.float32)
    bk = jnp.zeros((1, d_model), jnp.float32)
    bv = jnp.zeros((1, d_model), jnp.float32)
    bo = jnp.zeros((1, d_model), jnp.float32)
    b1 = jnp.zeros((1, 4 * d_model), jnp.float32)
    b2 = jnp.zeros((1, d_model), jnp.float32)
    g1 = jnp.ones((1, d_model), jnp.float32)
    be1 = jnp.zeros((1, d_model), jnp.float32)
    g2 = jnp.ones((1, d_model), jnp.float32)
    be2 = jnp.zeros((1, d_model), jnp.float32)
    return (wq, bq, wk, bk, wv, bv, wo, bo, w1, b1, w2, b2, g1, be1, g2, be2)


if __name__ == "__main__":
    d_model, n_layers, n_heads = 32, 2, 4
    B, S = 2, 8

    key = jax.random.PRNGKey(0)
    kx, kp = jax.random.split(key)
    x = jax.random.normal(kx, (B, S, d_model), jnp.float32)

    # key-padding mask: last position of batch 1 is masked out
    mask = jnp.ones((B, 1, S), jnp.float32)
    mask = mask.at[1, 0, S - 1].set(0.0)

    layer_keys = jax.random.split(kp, n_layers)
    all_layer_params = [init_layer_params(k, d_model) for k in layer_keys]

    out = encoder_pallas(x, mask, all_layer_params, n_heads)
    out = jax.block_until_ready(out)

    ref = encoder_ref(x, mask, all_layer_params, n_heads)
    ref = jax.block_until_ready(ref)

    assert out.shape == (B, S, d_model)
    # bf16 MXU matmuls vs f32 reference -> slightly loosened tolerance
    np.testing.assert_allclose(np.asarray(out), np.asarray(ref),
                               rtol=3e-2, atol=3e-2)
    print("KERNEL_OK")
</pallas_src>

<mosaic_0001>
module attributes {stable_mosaic.version = 11 : i64} {
  func.func @encoder_stack_kernel(%arg0: i32, %arg1: i32, %arg2: memref<1x8x32xf32, #tpu.memory_space<vmem>>, %arg3: memref<1x1x8xf32, #tpu.memory_space<vmem>>, %arg4: memref<1x32x96xbf16, #tpu.memory_space<vmem>>, %arg5: memref<1x32x32xbf16, #tpu.memory_space<vmem>>, %arg6: memref<1x32x128xbf16, #tpu.memory_space<vmem>>, %arg7: memref<1x128x32xbf16, #tpu.memory_space<vmem>>, %arg8: memref<1x8x128xf32, #tpu.memory_space<vmem>>, %arg9: memref<1x8x32xf32, #tpu.memory_space<vmem>>) attributes {dimension_semantics = [#tpu.dimension_semantics<parallel>, #tpu.dimension_semantics<arbitrary>], iteration_bounds = array<i64: 2, 2>, scalar_prefetch = 0 : i64, scratch_operands = 0 : i64, tpu.core_type = #tpu.core_type<tc>, window_params = [{transform_indices = @transform_0, window_bounds = array<i64: 1, 8, 32>}, {transform_indices = @transform_1, window_bounds = array<i64: 1, 1, 8>}, {transform_indices = @transform_2, window_bounds = array<i64: 1, 32, 96>}, {transform_indices = @transform_3, window_bounds = array<i64: 1, 32, 32>}, {transform_indices = @transform_4, window_bounds = array<i64: 1, 32, 128>}, {transform_indices = @transform_5, window_bounds = array<i64: 1, 128, 32>}, {transform_indices = @transform_6, window_bounds = array<i64: 1, 8, 128>}, {transform_indices = @transform_7, window_bounds = array<i64: 1, 8, 32>}]} {
    %c0_i32 = arith.constant 0 : i32
    %0 = arith.cmpi eq, %arg1, %c0_i32 : i32
    %1 = arith.extui %0 : i1 to i32
    %c0_i32_0 = arith.constant 0 : i32
    %2 = arith.cmpi ne, %1, %c0_i32_0 : i32
    scf.if %2 {
      %c0_46 = arith.constant 0 : index
      %c0_47 = arith.constant 0 : index
      %c0_48 = arith.constant 0 : index
      %158 = vector.load %arg2[%c0_46, %c0_47, %c0_48] : memref<1x8x32xf32, #tpu.memory_space<vmem>>, vector<1x8x32xf32>
      %c0_49 = arith.constant 0 : index
      %c0_50 = arith.constant 0 : index
      %c0_51 = arith.constant 0 : index
      %159 = vector.load %arg9[%c0_49, %c0_50, %c0_51] : memref<1x8x32xf32, #tpu.memory_space<vmem>>, vector<1x8x32xf32>
      tpu.vector_store %arg9[%c0_49, %c0_50, %c0_51], %158 {strides = array<i32>} : memref<1x8x32xf32, #tpu.memory_space<vmem>>, vector<1x8x32xf32>,
    } else {
    }
    %c0 = arith.constant 0 : index
    %c0_1 = arith.constant 0 : index
    %c0_2 = arith.constant 0 : index
    %3 = vector.load %arg9[%c0, %c0_1, %c0_2] : memref<1x8x32xf32, #tpu.memory_space<vmem>>, vector<1x8x32xf32>
    %4 = vector.shape_cast %3 : vector<1x8x32xf32> to vector<8x32xf32>
    %c0_3 = arith.constant 0 : index
    %c0_4 = arith.constant 0 : index
    %c0_5 = arith.constant 0 : index
    %5 = vector.load %arg8[%c0_3, %c0_4, %c0_5] : memref<1x8x128xf32, #tpu.memory_space<vmem>>, vector<1x8x128xf32>
    %6 = vector.shape_cast %5 : vector<1x8x128xf32> to vector<8x128xf32>
    %7 = vector.extract_strided_slice %6 {offsets = [0, 0], sizes = [1, 32], strides = [1, 1]} : vector<8x128xf32> to vector<1x32xf32>
    %8 = vector.extract_strided_slice %6 {offsets = [1, 0], sizes = [1, 32], strides = [1, 1]} : vector<8x128xf32> to vector<1x32xf32>
    %9 = vector.extract_strided_slice %6 {offsets = [2, 0], sizes = [1, 32], strides = [1, 1]} : vector<8x128xf32> to vector<1x32xf32>
    %10 = vector.extract_strided_slice %6 {offsets = [3, 0], sizes = [1, 32], strides = [1, 1]} : vector<8x128xf32> to vector<1x32xf32>
    %11 = vector.extract_strided_slice %6 {offsets = [4, 0], sizes = [1, 32], strides = [1, 1]} : vector<8x128xf32> to vector<1x32xf32>
    %12 = vector.extract_strided_slice %6 {offsets = [5, 0], sizes = [1, 32], strides = [1, 1]} : vector<8x128xf32> to vector<1x32xf32>
    %13 = vector.extract_strided_slice %6 {offsets = [6, 0], sizes = [1, 128], strides = [1, 1]} : vector<8x128xf32> to vector<1x128xf32>
    %14 = vector.extract_strided_slice %6 {offsets = [7, 0], sizes = [1, 96], strides = [1, 1]} : vector<8x128xf32> to vector<1x96xf32>
    %15 = arith.truncf %4 : vector<8x32xf32> to vector<8x32xbf16>
    %c0_6 = arith.constant 0 : index
    %c0_7 = arith.constant 0 : index
    %c0_8 = arith.constant 0 : index
    %16 = vector.load %arg4[%c0_6, %c0_7, %c0_8] : memref<1x32x96xbf16, #tpu.memory_space<vmem>>, vector<1x32x96xbf16>
    %17 = vector.shape_cast %16 : vector<1x32x96xbf16> to vector<32x96xbf16>
    %cst = arith.constant dense<0.000000e+00> : vector<8x96xf32>
    %18 = tpu.matmul %15, %17, %cst {dimension_numbers = #tpu.dot_dimension_numbers<[1], [0], [0], [1], [0, 0, 1, 1], [], []>} : vector<8x32xbf16>, vector<32x96xbf16>, vector<8x96xf32> -> vector<8x96xf32>
    %19 = vector.broadcast %14 : vector<1x96xf32> to vector<8x96xf32>
    %20 = arith.addf %18, %19 : vector<8x96xf32>
    %21 = vector.extract_strided_slice %20 {offsets = [0, 0], sizes = [8, 32], strides = [1, 1]} : vector<8x96xf32> to vector<8x32xf32>
    %22 = arith.truncf %21 : vector<8x32xf32> to vector<8x32xbf16>
    %23 = vector.extract_strided_slice %22 {offsets = [0, 0], sizes = [8, 8], strides = [1, 1]} : vector<8x32xbf16> to vector<8x8xbf16>
    %24 = vector.extract_strided_slice %22 {offsets = [0, 8], sizes = [8, 8], strides = [1, 1]} : vector<8x32xbf16> to vector<8x8xbf16>
    %25 = vector.extract_strided_slice %22 {offsets = [0, 16], sizes = [8, 8], strides = [1, 1]} : vector<8x32xbf16> to vector<8x8xbf16>
    %26 = vector.extract_strided_slice %22 {offsets = [0, 24], sizes = [8, 8], strides = [1, 1]} : vector<8x32xbf16> to vector<8x8xbf16>
    %27 = vector.shape_cast %23 : vector<8x8xbf16> to vector<1x8x8xbf16>
    %28 = vector.shape_cast %24 : vector<8x8xbf16> to vector<1x8x8xbf16>
    %29 = vector.shape_cast %25 : vector<8x8xbf16> to vector<1x8x8xbf16>
    %30 = vector.shape_cast %26 : vector<8x8xbf16> to vector<1x8x8xbf16>
    %31 = tpu.concatenate %27, %28, %29, %30 in 0 : vector<1x8x8xbf16>, vector<1x8x8xbf16>, vector<1x8x8xbf16>, vector<1x8x8xbf16> -> vector<4x8x8xbf16>
    %32 = vector.extract_strided_slice %20 {offsets = [0, 32], sizes = [8, 32], strides = [1, 1]} : vector<8x96xf32> to vector<8x32xf32>
    %33 = arith.truncf %32 : vector<8x32xf32> to vector<8x32xbf16>
    %34 = vector.extract_strided_slice %33 {offsets = [0, 0], sizes = [8, 8], strides = [1, 1]} : vector<8x32xbf16> to vector<8x8xbf16>
    %35 = vector.extract_strided_slice %33 {offsets = [0, 8], sizes = [8, 8], strides = [1, 1]} : vector<8x32xbf16> to vector<8x8xbf16>
    %36 = vector.extract_strided_slice %33 {offsets = [0, 16], sizes = [8, 8], strides = [1, 1]} : vector<8x32xbf16> to vector<8x8xbf16>
    %37 = vector.extract_strided_slice %33 {offsets = [0, 24], sizes = [8, 8], strides = [1, 1]} : vector<8x32xbf16> to vector<8x8xbf16>
    %38 = vector.shape_cast %34 : vector<8x8xbf16> to vector<1x8x8xbf16>
    %39 = vector.shape_cast %35 : vector<8x8xbf16> to vector<1x8x8xbf16>
    %40 = vector.shape_cast %36 : vector<8x8xbf16> to vector<1x8x8xbf16>
    %41 = vector.shape_cast %37 : vector<8x8xbf16> to vector<1x8x8xbf16>
    %42 = tpu.concatenate %38, %39, %40, %41 in 0 : vector<1x8x8xbf16>, vector<1x8x8xbf16>, vector<1x8x8xbf16>, vector<1x8x8xbf16> -> vector<4x8x8xbf16>
    %43 = vector.extract_strided_slice %20 {offsets = [0, 64], sizes = [8, 32], strides = [1, 1]} : vector<8x96xf32> to vector<8x32xf32>
    %44 = arith.truncf %43 : vector<8x32xf32> to vector<8x32xbf16>
    %45 = vector.extract_strided_slice %44 {offsets = [0, 0], sizes = [8, 8], strides = [1, 1]} : vector<8x32xbf16> to vector<8x8xbf16>
    %46 = vector.extract_strided_slice %44 {offsets = [0, 8], sizes = [8, 8], strides = [1, 1]} : vector<8x32xbf16> to vector<8x8xbf16>
    %47 = vector.extract_strided_slice %44 {offsets = [0, 16], sizes = [8, 8], strides = [1, 1]} : vector<8x32xbf16> to vector<8x8xbf16>
    %48 = vector.extract_strided_slice %44 {offsets = [0, 24], sizes = [8, 8], strides = [1, 1]} : vector<8x32xbf16> to vector<8x8xbf16>
    %49 = vector.shape_cast %45 : vector<8x8xbf16> to vector<1x8x8xbf16>
    %50 = vector.shape_cast %46 : vector<8x8xbf16> to vector<1x8x8xbf16>
    %51 = vector.shape_cast %47 : vector<8x8xbf16> to vector<1x8x8xbf16>
    %52 = vector.shape_cast %48 : vector<8x8xbf16> to vector<1x8x8xbf16>
    %53 = tpu.concatenate %49, %50, %51, %52 in 0 : vector<1x8x8xbf16>, vector<1x8x8xbf16>, vector<1x8x8xbf16>, vector<1x8x8xbf16> -> vector<4x8x8xbf16>
    %cst_9 = arith.constant dense<0.000000e+00> : vector<4x8x8xf32>
    %54 = tpu.matmul %31, %42, %cst_9 {dimension_numbers = #tpu.dot_dimension_numbers<[2], [2], [1], [1], [0, 0, 0, 1, 1, 1], [0], [0]>} : vector<4x8x8xbf16>, vector<4x8x8xbf16>, vector<4x8x8xf32> -> vector<4x8x8xf32>
    %c0_10 = arith.constant 0 : index
    %c0_11 = arith.constant 0 : index
    %c0_12 = arith.constant 0 : index
    %55 = vector.load %arg3[%c0_10, %c0_11, %c0_12] : memref<1x1x8xf32, #tpu.memory_space<vmem>>, vector<1x1x8xf32>
    %56 = vector.shape_cast %55 : vector<1x1x8xf32> to vector<1x8xf32>
    %cst_13 = arith.constant 1.000000e+00 : f32
    %57 = vector.broadcast %cst_13 : f32 to vector<1x8xf32>
    %58 = arith.subf %56, %57 : vector<1x8xf32>
    %cst_14 = arith.constant 1.000000e+09 : f32
    %59 = vector.broadcast %cst_14 : f32 to vector<1x8xf32>
    %60 = arith.mulf %58, %59 : vector<1x8xf32>
    %61 = vector.shape_cast %60 : vector<1x8xf32> to vector<1x1x8xf32>
    %62 = vector.broadcast %61 : vector<1x1x8xf32> to vector<4x8x8xf32>
    %63 = arith.addf %54, %62 : vector<4x8x8xf32>
    %cst_15 = arith.constant dense<0xFF800000> : vector<4x8xf32>
    %64 = vector.multi_reduction <maximumf>, %63, %cst_15 [2] : vector<4x8x8xf32> to vector<4x8xf32>
    %65 = vector.shape_cast %64 : vector<4x8xf32> to vector<4x8x1xf32>
    %66 = vector.broadcast %65 : vector<4x8x1xf32> to vector<4x8x8xf32>
    %67 = arith.subf %63, %66 : vector<4x8x8xf32>
    %68 = math.exp %67 : vector<4x8x8xf32>
    %cst_16 = arith.constant dense<0.000000e+00> : vector<4x8xf32>
    %69 = vector.multi_reduction <add>, %68, %cst_16 [2] : vector<4x8x8xf32> to vector<4x8xf32>
    %70 = vector.shape_cast %69 : vector<4x8xf32> to vector<4x8x1xf32>
    %71 = arith.truncf %68 : vector<4x8x8xf32> to vector<4x8x8xbf16>
    %cst_17 = arith.constant dense<0.000000e+00> : vector<4x8x8xf32>
    %72 = tpu.matmul %71, %53, %cst_17 {dimension_numbers = #tpu.dot_dimension_numbers<[2], [1], [1], [2], [0, 0, 0, 1, 1, 2], [0], [0]>} : vector<4x8x8xbf16>, vector<4x8x8xbf16>, vector<4x8x8xf32> -> vector<4x8x8xf32>
    %73 = tpu.reciprocal %70 {approx = true} : vector<4x8x1xf32> -> vector<4x8x1xf32>
    %74 = vector.broadcast %73 : vector<4x8x1xf32> to vector<4x8x8xf32>
    %75 = arith.mulf %72, %74 : vector<4x8x8xf32>
    %76 = vector.extract_strided_slice %75 {offsets = [0, 0, 0], sizes = [1, 8, 8], strides = [1, 1, 1]} : vector<4x8x8xf32> to vector<1x8x8xf32>
    %77 = vector.shape_cast %76 : vector<1x8x8xf32> to vector<8x8xf32>
    %78 = vector.extract_strided_slice %75 {offsets = [1, 0, 0], sizes = [1, 8, 8], strides = [1, 1, 1]} : vector<4x8x8xf32> to vector<1x8x8xf32>
    %79 = vector.shape_cast %78 : vector<1x8x8xf32> to vector<8x8xf32>
    %80 = vector.extract_strided_slice %75 {offsets = [2, 0, 0], sizes = [1, 8, 8], strides = [1, 1, 1]} : vector<4x8x8xf32> to vector<1x8x8xf32>
    %81 = vector.shape_cast %80 : vector<1x8x8xf32> to vector<8x8xf32>
    %82 = vector.extract_strided_slice %75 {offsets = [3, 0, 0], sizes = [1, 8, 8], strides = [1, 1, 1]} : vector<4x8x8xf32> to vector<1x8x8xf32>
    %83 = vector.shape_cast %82 : vector<1x8x8xf32> to vector<8x8xf32>
    %84 = tpu.concatenate %77, %79, %81, %83 in 1 : vector<8x8xf32>, vector<8x8xf32>, vector<8x8xf32>, vector<8x8xf32> -> vector<8x32xf32>
    %85 = arith.truncf %84 : vector<8x32xf32> to vector<8x32xbf16>
    %c0_18 = arith.constant 0 : index
    %c0_19 = arith.constant 0 : index
    %c0_20 = arith.constant 0 : index
    %86 = vector.load %arg5[%c0_18, %c0_19, %c0_20] : memref<1x32x32xbf16, #tpu.memory_space<vmem>>, vector<1x32x32xbf16>
    %87 = vector.shape_cast %86 : vector<1x32x32xbf16> to vector<32x32xbf16>
    %cst_21 = arith.constant dense<0.000000e+00> : vector<8x32xf32>
    %88 = tpu.matmul %85, %87, %cst_21 {dimension_numbers = #tpu.dot_dimension_numbers<[1], [0], [0], [1], [0, 0, 1, 1], [], []>} : vector<8x32xbf16>, vector<32x32xbf16>, vector<8x32xf32> -> vector<8x32xf32>
    %89 = vector.broadcast %7 : vector<1x32xf32> to vector<8x32xf32>
    %90 = arith.addf %88, %89 : vector<8x32xf32>
    %91 = arith.addf %4, %90 : vector<8x32xf32>
    %cst_22 = arith.constant dense<0.000000e+00> : vector<8xf32>
    %92 = vector.multi_reduction <add>, %91, %cst_22 [1] : vector<8x32xf32> to vector<8xf32>
    %93 = vector.shape_cast %92 : vector<8xf32> to vector<8x1xf32>
    %94 = arith.mulf %91, %91 : vector<8x32xf32>
    %cst_23 = arith.constant dense<0.000000e+00> : vector<8xf32>
    %95 = vector.multi_reduction <add>, %94, %cst_23 [1] : vector<8x32xf32> to vector<8xf32>
    %96 = vector.shape_cast %95 : vector<8xf32> to vector<8x1xf32>
    %cst_24 = arith.constant 3.125000e-02 : f32
    %97 = vector.broadcast %cst_24 : f32 to vector<8x1xf32>
    %98 = arith.mulf %93, %97 : vector<8x1xf32>
    %cst_25 = arith.constant 3.125000e-02 : f32
    %99 = vector.broadcast %cst_25 : f32 to vector<8x1xf32>
    %100 = arith.mulf %96, %99 : vector<8x1xf32>
    %101 = arith.mulf %98, %98 : vector<8x1xf32>
    %102 = arith.subf %100, %101 : vector<8x1xf32>
    %cst_26 = arith.constant 0.000000e+00 : f32
    %103 = vector.broadcast %cst_26 : f32 to vector<8x1xf32>
    %104 = arith.maximumf %102, %103 : vector<8x1xf32>
    %105 = vector.broadcast %98 : vector<8x1xf32> to vector<8x32xf32>
    %106 = arith.subf %91, %105 : vector<8x32xf32>
    %cst_27 = arith.constant 9.99999974E-6 : f32
    %107 = vector.broadcast %cst_27 : f32 to vector<8x1xf32>
    %108 = arith.addf %104, %107 : vector<8x1xf32>
    %109 = math.rsqrt %108 : vector<8x1xf32>
    %110 = vector.broadcast %109 : vector<8x1xf32> to vector<8x32xf32>
    %111 = arith.mulf %106, %110 : vector<8x32xf32>
    %112 = vector.broadcast %9 : vector<1x32xf32> to vector<8x32xf32>
    %113 = arith.mulf %111, %112 : vector<8x32xf32>
    %114 = vector.broadcast %10 : vector<1x32xf32> to vector<8x32xf32>
    %115 = arith.addf %113, %114 : vector<8x32xf32>
    %116 = arith.truncf %115 : vector<8x32xf32> to vector<8x32xbf16>
    %c0_28 = arith.constant 0 : index
    %c0_29 = arith.constant 0 : index
    %c0_30 = arith.constant 0 : index
    %117 = vector.load %arg6[%c0_28, %c0_29, %c0_30] : memref<1x32x128xbf16, #tpu.memory_space<vmem>>, vector<1x32x128xbf16>
    %118 = vector.shape_cast %117 : vector<1x32x128xbf16> to vector<32x128xbf16>
    %cst_31 = arith.constant dense<0.000000e+00> : vector<8x128xf32>
    %119 = tpu.matmul %116, %118, %cst_31 {dimension_numbers = #tpu.dot_dimension_numbers<[1], [0], [0], [1], [0, 0, 1, 1], [], []>} : vector<8x32xbf16>, vector<32x128xbf16>, vector<8x128xf32> -> vector<8x128xf32>
    %120 = vector.broadcast %13 : vector<1x128xf32> to vector<8x128xf32>
    %121 = arith.addf %119, %120 : vector<8x128xf32>
    %cst_32 = arith.constant 0.000000e+00 : f32
    %122 = vector.broadcast %cst_32 : f32 to vector<8x128xf32>
    %123 = arith.maximumf %121, %122 : vector<8x128xf32>
    %124 = arith.truncf %123 : vector<8x128xf32> to vector<8x128xbf16>
    %c0_33 = arith.constant 0 : index
    %c0_34 = arith.constant 0 : index
    %c0_35 = arith.constant 0 : index
    %125 = vector.load %arg7[%c0_33, %c0_34, %c0_35] : memref<1x128x32xbf16, #tpu.memory_space<vmem>>, vector<1x128x32xbf16>
    %126 = vector.shape_cast %125 : vector<1x128x32xbf16> to vector<128x32xbf16>
    %cst_36 = arith.constant dense<0.000000e+00> : vector<8x32xf32>
    %127 = tpu.matmul %124, %126, %cst_36 {dimension_numbers = #tpu.dot_dimension_numbers<[1], [0], [0], [1], [0, 0, 1, 1], [], []>} : vector<8x128xbf16>, vector<128x32xbf16>, vector<8x32xf32> -> vector<8x32xf32>
    %128 = vector.broadcast %8 : vector<1x32xf32> to vector<8x32xf32>
    %129 = arith.addf %127, %128 : vector<8x32xf32>
    %130 = arith.addf %129, %4 : vector<8x32xf32>
    %cst_37 = arith.constant dense<0.000000e+00> : vector<8xf32>
    %131 = vector.multi_reduction <add>, %130, %cst_37 [1] : vector<8x32xf32> to vector<8xf32>
    %132 = vector.shape_cast %131 : vector<8xf32> to vector<8x1xf32>
    %133 = arith.mulf %130, %130 : vector<8x32xf32>
    %cst_38 = arith.constant dense<0.000000e+00> : vector<8xf32>
    %134 = vector.multi_reduction <add>, %133, %cst_38 [1] : vector<8x32xf32> to vector<8xf32>
    %135 = vector.shape_cast %134 : vector<8xf32> to vector<8x1xf32>
    %cst_39 = arith.constant 3.125000e-02 : f32
    %136 = vector.broadcast %cst_39 : f32 to vector<8x1xf32>
    %137 = arith.mulf %132, %136 : vector<8x1xf32>
    %cst_40 = arith.constant 3.125000e-02 : f32
    %138 = vector.broadcast %cst_40 : f32 to vector<8x1xf32>
    %139 = arith.mulf %135, %138 : vector<8x1xf32>
    %140 = arith.mulf %137, %137 : vector<8x1xf32>
    %141 = arith.subf %139, %140 : vector<8x1xf32>
    %cst_41 = arith.constant 0.000000e+00 : f32
    %142 = vector.broadcast %cst_41 : f32 to vector<8x1xf32>
    %143 = arith.maximumf %141, %142 : vector<8x1xf32>
    %144 = vector.broadcast %137 : vector<8x1xf32> to vector<8x32xf32>
    %145 = arith.subf %130, %144 : vector<8x32xf32>
    %cst_42 = arith.constant 9.99999974E-6 : f32
    %146 = vector.broadcast %cst_42 : f32 to vector<8x1xf32>
    %147 = arith.addf %143, %146 : vector<8x1xf32>
    %148 = math.rsqrt %147 : vector<8x1xf32>
    %149 = vector.broadcast %148 : vector<8x1xf32> to vector<8x32xf32>
    %150 = arith.mulf %145, %149 : vector<8x32xf32>
    %151 = vector.broadcast %11 : vector<1x32xf32> to vector<8x32xf32>
    %152 = arith.mulf %150, %151 : vector<8x32xf32>
    %153 = vector.broadcast %12 : vector<1x32xf32> to vector<8x32xf32>
    %154 = arith.addf %152, %153 : vector<8x32xf32>
    %c0_43 = arith.constant 0 : index
    %c0_44 = arith.constant 0 : index
    %c0_45 = arith.constant 0 : index
    %155 = vector.load %arg9[%c0_43, %c0_44, %c0_45] : memref<1x8x32xf32, #tpu.memory_space<vmem>>, vector<1x8x32xf32>
    %156 = vector.shape_cast %155 : vector<1x8x32xf32> to vector<8x32xf32>
    %157 = vector.shape_cast %154 : vector<8x32xf32> to vector<1x8x32xf32>
    tpu.vector_store %arg9[%c0_43, %c0_44, %c0_45], %157 {strides = array<i32>} : memref<1x8x32xf32, #tpu.memory_space<vmem>>, vector<1x8x32xf32>,
    return
  }
  func.func @transform_0(%arg0: i32, %arg1: i32) -> (i32, i32, i32) {
    %c0_i32 = arith.constant 0 : i32
    %c0_i32_0 = arith.constant 0 : i32
    %c0_i32_1 = arith.constant 0 : i32
    return %arg0, %c0_i32, %c0_i32_0 : i32, i32, i32
  }
  func.func @transform_1(%arg0: i32, %arg1: i32) -> (i32, i32, i32) {
    %c0_i32 = arith.constant 0 : i32
    %c0_i32_0 = arith.constant 0 : i32
    %c0_i32_1 = arith.constant 0 : i32
    return %arg0, %c0_i32, %c0_i32_0 : i32, i32, i32
  }
  func.func @transform_2(%arg0: i32, %arg1: i32) -> (i32, i32, i32) {
    %c0_i32 = arith.constant 0 : i32
    %c0_i32_0 = arith.constant 0 : i32
    %c0_i32_1 = arith.constant 0 : i32
    return %arg1, %c0_i32, %c0_i32_0 : i32, i32, i32
  }
  func.func @transform_3(%arg0: i32, %arg1: i32) -> (i32, i32, i32) {
    %c0_i32 = arith.constant 0 : i32
    %c0_i32_0 = arith.constant 0 : i32
    %c0_i32_1 = arith.constant 0 : i32
    return %arg1, %c0_i32, %c0_i32_0 : i32, i32, i32
  }
  func.func @transform_4(%arg0: i32, %arg1: i32) -> (i32, i32, i32) {
    %c0_i32 = arith.constant 0 : i32
    %c0_i32_0 = arith.constant 0 : i32
    %c0_i32_1 = arith.constant 0 : i32
    return %arg1, %c0_i32, %c0_i32_0 : i32, i32, i32
  }
  func.func @transform_5(%arg0: i32, %arg1: i32) -> (i32, i32, i32) {
    %c0_i32 = arith.constant 0 : i32
    %c0_i32_0 = arith.constant 0 : i32
    %c0_i32_1 = arith.constant 0 : i32
    return %arg1, %c0_i32, %c0_i32_0 : i32, i32, i32
  }
  func.func @transform_6(%arg0: i32, %arg1: i32) -> (i32, i32, i32) {
    %c0_i32 = arith.constant 0 : i32
    %c0_i32_0 = arith.constant 0 : i32
    %c0_i32_1 = arith.constant 0 : i32
    return %arg1, %c0_i32, %c0_i32_0 : i32, i32, i32
  }
  func.func @transform_7(%arg0: i32, %arg1: i32) -> (i32, i32, i32) {
    %c0_i32 = arith.constant 0 : i32
    %c0_i32_0 = arith.constant 0 : i32
    %c0_i32_1 = arith.constant 0 : i32
    return %arg0, %c0_i32, %c0_i32_0 : i32, i32, i32
  }
}

</mosaic_0001>

<llo_original>
// kernel: tpu_custom_call.1
$region0: #{tpu_custom_call.1}
  #allocation0 [shape = 'u32[]', space=smem, size = 0x4, offset = 0x4, fixed_abs, tag = 'smem constant byte address 0x4 - core index']
  #allocation1 [shape = 'u32[72,128]{1,0:T(1,128)}', space=vmem, size = 0x9000, scoped, tag = 'internal scratch']
  %s0 = inlined_call_operand.vmem [shape: f32[2,8,32], index: 0, kind: input, shape index: {}]
  %s1 = inlined_call_operand.vmem [shape: f32[2,1,8], index: 1, kind: input, shape index: {}]
  %s2 = inlined_call_operand.vmem [shape: bf16[2,32,96], index: 2, kind: input, shape index: {}]
  %s3 = inlined_call_operand.vmem [shape: bf16[2,32,32], index: 3, kind: input, shape index: {}]
  %s4 = inlined_call_operand.vmem [shape: bf16[2,32,128], index: 4, kind: input, shape index: {}]
  %s5 = inlined_call_operand.vmem [shape: bf16[2,128,32], index: 5, kind: input, shape index: {}]
  %s6 = inlined_call_operand.vmem [shape: f32[2,8,128], index: 6, kind: input, shape index: {}]
  %s7 = inlined_call_operand.hbm [shape: f32[2,8,32], index: 7, kind: output, shape index: {}]
  %s8 = sld [smem:[#allocation0]]
  $region65: #{tpu_custom_call.1} parent=0
    _
  %s10 = ssub.s32 1, %s8
  %s11 = scalar_select 0, %s10, %s8
  $region1: #{tpu_custom_call.1} parent=0
    #allocation2 [shape = 'u8[8192]{0}', space=vmem, size = 0x2000, scoped, tag = 'output window, operand 0']
    #allocation3 [shape = 's32[2]{0}', space=sflag, size = 0x8, scoped, tag = 'scoped memory for tpu_custom_call.1']
    %12 = vsyncpa [#allocation3], 0
    %s13 = scalar_lea.sflag [#allocation3], 1
    %14 = vsyncpa %s13, 0
    loop: start=0, step=1, limit=6
    $region2: #{tpu_custom_call.1} parent=1 // loop_pre_header
      _
    $region3: #{tpu_custom_call.1} parent=1 // loop_header
      %s16 = sphi 0, %s20
      %p17 = scmp.ge.s32.totalorder %s16, 6
      %s23 = sphi 0, %s35
      %s24 = sphi 0, %s31
      %s25 = sphi 0, %s23
      %s26 = sphi 0, %s24
      %s27 = sphi 0, %s25
      %s28 = sphi 0, %s26
      %s38 = sphi 0, %s40
      %s41 = sphi 0, %s38
      %s42 = sphi 0, %s41
      %s58 = sphi 0, %s42
      %s64 = sphi 0, %s66
      %s67 = sphi 0, %s64
      %s68 = sphi 0, %s67
      %s84 = sphi 0, %s68
      %s90 = sphi 0, %s92
      %s93 = sphi 0, %s90
      %s94 = sphi 0, %s93
      %s110 = sphi 0, %s94
      %s116 = sphi 0, %s118
      %s119 = sphi 0, %s116
      %s120 = sphi 0, %s119
      %s136 = sphi 0, %s120
      %s142 = sphi 0, %s144
      %s145 = sphi 0, %s142
      %s146 = sphi 0, %s145
      %s162 = sphi 0, %s146
      %s168 = sphi 0, %s170
      %s171 = sphi 0, %s168
      %s172 = sphi 0, %s171
      %s188 = sphi 0, %s172
      %s194 = sphi 0, %s196
      %s197 = sphi 0, %s194
      %s198 = sphi 0, %s197
      %s214 = sphi 0, %s198
      %s220 = sphi 0, %s222
      %s223 = sphi 0, %s220
      %s224 = sphi 0, %s223
      %s240 = sphi 0, %s224
    $region4: #{tpu_custom_call.1} parent=1 // loop_header_branch
      %19 = sbr.rel (%p17) target = $region8
    $region5: #{tpu_custom_call.1} parent=1 // loop_body
      %s21 = ssub.s32 %s16, 1
      %s22 = ssub.s32 %s16, 2
      %s29 = sadd.s32 1, %s24
      %p30 = scmp.ge.s32.totalorder %s29, 2
      %s31 = scalar_select %p30, 0, %s29
      %s32 = sadd.s32 1, %s23
      %s33 = scalar_select %p30, %s32, %s23
      %p34 = scmp.ge.s32.totalorder %s33, 2
      %s35 = scalar_select %p34, 0, %s33
      %s36 = ssub.s32 %s23, %s35
      %p37 = scmp.eq.s32.totalorder %s36, 0
      %s39 = sadd.s32 %s38, 1
      %s40 = scalar_select %p37, %s38, %s39
      %p43 = pneg %p37
      %p44 = scmp.eq.s32.totalorder %s16, 3
      %p45 = por %p43, %p44
      %p46 = scmp.ne.s32.totalorder %s38, %s41
      %p47 = scmp.eq.s32.totalorder %s16, 0
      %p48 = por %p46, %p47
      %p49 = scmp.ne.s32.totalorder %s38, %s41
      %p50 = scmp.eq.s32.totalorder %s21, 3
      %p51 = por %p49, %p50
      %p52 = scmp.ne.s32.totalorder %s41, %s42
      %p53 = scmp.eq.s32.totalorder %s21, 0
      %p54 = por %p52, %p53
      %p55 = scmp.ne.s32.totalorder %s41, %s42
      %p56 = scmp.eq.s32.totalorder %s22, 3
      %p57 = por %p55, %p56
      %p59 = scmp.ne.s32.totalorder %s42, %s58
      %p60 = scmp.eq.s32.totalorder %s22, 0
      %p61 = por %p59, %p60
      %s62 = ssub.s32 %s23, %s35
      %p63 = scmp.eq.s32.totalorder %s62, 0
      %s65 = sadd.s32 %s64, 1
      %s66 = scalar_select %p63, %s64, %s65
      %p69 = pneg %p63
      %p70 = scmp.eq.s32.totalorder %s16, 3
      %p71 = por %p69, %p70
      %p72 = scmp.ne.s32.totalorder %s64, %s67
      %p73 = scmp.eq.s32.totalorder %s16, 0
      %p74 = por %p72, %p73
      %p75 = scmp.ne.s32.totalorder %s64, %s67
      %p76 = scmp.eq.s32.totalorder %s21, 3
      %p77 = por %p75, %p76
      %p78 = scmp.ne.s32.totalorder %s67, %s68
      %p79 = scmp.eq.s32.totalorder %s21, 0
      %p80 = por %p78, %p79
      %p81 = scmp.ne.s32.totalorder %s67, %s68
      %p82 = scmp.eq.s32.totalorder %s22, 3
      %p83 = por %p81, %p82
      %p85 = scmp.ne.s32.totalorder %s68, %s84
      %p86 = scmp.eq.s32.totalorder %s22, 0
      %p87 = por %p85, %p86
      %s88 = ssub.s32 %s24, %s31
      %p89 = scmp.eq.s32.totalorder %s88, 0
      %s91 = sadd.s32 %s90, 1
      %s92 = scalar_select %p89, %s90, %s91
      %p95 = pneg %p89
      %p96 = scmp.eq.s32.totalorder %s16, 3
      %p97 = por %p95, %p96
      %p98 = scmp.ne.s32.totalorder %s90, %s93
      %p99 = scmp.eq.s32.totalorder %s16, 0
      %p100 = por %p98, %p99
      %p101 = scmp.ne.s32.totalorder %s90, %s93
      %p102 = scmp.eq.s32.totalorder %s21, 3
      %p103 = por %p101, %p102
      %p104 = scmp.ne.s32.totalorder %s93, %s94
      %p105 = scmp.eq.s32.totalorder %s21, 0
      %p106 = por %p104, %p105
      %p107 = scmp.ne.s32.totalorder %s93, %s94
      %p108 = scmp.eq.s32.totalorder %s22, 3
      %p109 = por %p107, %p108
      %p111 = scmp.ne.s32.totalorder %s94, %s110
      %p112 = scmp.eq.s32.totalorder %s22, 0
      %p113 = por %p111, %p112
      %s114 = ssub.s32 %s24, %s31
      %p115 = scmp.eq.s32.totalorder %s114, 0
      %s117 = sadd.s32 %s116, 1
      %s118 = scalar_select %p115, %s116, %s117
      %p121 = pneg %p115
      %p122 = scmp.eq.s32.totalorder %s16, 3
      %p123 = por %p121, %p122
      %p124 = scmp.ne.s32.totalorder %s116, %s119
      %p125 = scmp.eq.s32.totalorder %s16, 0
      %p126 = por %p124, %p125
      %p127 = scmp.ne.s32.totalorder %s116, %s119
      %p128 = scmp.eq.s32.totalorder %s21, 3
      %p129 = por %p127, %p128
      %p130 = scmp.ne.s32.totalorder %s119, %s120
      %p131 = scmp.eq.s32.totalorder %s21, 0
      %p132 = por %p130, %p131
      %p133 = scmp.ne.s32.totalorder %s119, %s120
      %p134 = scmp.eq.s32.totalorder %s22, 3
      %p135 = por %p133, %p134
      %p137 = scmp.ne.s32.totalorder %s120, %s136
      %p138 = scmp.eq.s32.totalorder %s22, 0
      %p139 = por %p137, %p138
      %s140 = ssub.s32 %s24, %s31
      %p141 = scmp.eq.s32.totalorder %s140, 0
      %s143 = sadd.s32 %s142, 1
      %s144 = scalar_select %p141, %s142, %s143
      %p147 = pneg %p141
      %p148 = scmp.eq.s32.totalorder %s16, 3
      %p149 = por %p147, %p148
      %p150 = scmp.ne.s32.totalorder %s142, %s145
      %p151 = scmp.eq.s32.totalorder %s16, 0
      %p152 = por %p150, %p151
      %p153 = scmp.ne.s32.totalorder %s142, %s145
      %p154 = scmp.eq.s32.totalorder %s21, 3
      %p155 = por %p153, %p154
      %p156 = scmp.ne.s32.totalorder %s145, %s146
      %p157 = scmp.eq.s32.totalorder %s21, 0
      %p158 = por %p156, %p157
      %p159 = scmp.ne.s32.totalorder %s145, %s146
      %p160 = scmp.eq.s32.totalorder %s22, 3
      %p161 = por %p159, %p160
      %p163 = scmp.ne.s32.totalorder %s146, %s162
      %p164 = scmp.eq.s32.totalorder %s22, 0
      %p165 = por %p163, %p164
      %s166 = ssub.s32 %s24, %s31
      %p167 = scmp.eq.s32.totalorder %s166, 0
      %s169 = sadd.s32 %s168, 1
      %s170 = scalar_select %p167, %s168, %s169
      %p173 = pneg %p167
      %p174 = scmp.eq.s32.totalorder %s16, 3
      %p175 = por %p173, %p174
      %p176 = scmp.ne.s32.totalorder %s168, %s171
      %p177 = scmp.eq.s32.totalorder %s16, 0
      %p178 = por %p176, %p177
      %p179 = scmp.ne.s32.totalorder %s168, %s171
      %p180 = scmp.eq.s32.totalorder %s21, 3
      %p181 = por %p179, %p180
      %p182 = scmp.ne.s32.totalorder %s171, %s172
      %p183 = scmp.eq.s32.totalorder %s21, 0
      %p184 = por %p182, %p183
      %p185 = scmp.ne.s32.totalorder %s171, %s172
      %p186 = scmp.eq.s32.totalorder %s22, 3
      %p187 = por %p185, %p186
      %p189 = scmp.ne.s32.totalorder %s172, %s188
      %p190 = scmp.eq.s32.totalorder %s22, 0
      %p191 = por %p189, %p190
      %s192 = ssub.s32 %s24, %s31
      %p193 = scmp.eq.s32.totalorder %s192, 0
      %s195 = sadd.s32 %s194, 1
      %s196 = scalar_select %p193, %s194, %s195
      %p199 = pneg %p193
      %p200 = scmp.eq.s32.totalorder %s16, 3
      %p201 = por %p199, %p200
      %p202 = scmp.ne.s32.totalorder %s194, %s197
      %p203 = scmp.eq.s32.totalorder %s16, 0
      %p204 = por %p202, %p203
      %p205 = scmp.ne.s32.totalorder %s194, %s197
      %p206 = scmp.eq.s32.totalorder %s21, 3
      %p207 = por %p205, %p206
      %p208 = scmp.ne.s32.totalorder %s197, %s198
      %p209 = scmp.eq.s32.totalorder %s21, 0
      %p210 = por %p208, %p209
      %p211 = scmp.ne.s32.totalorder %s197, %s198
      %p212 = scmp.eq.s32.totalorder %s22, 3
      %p213 = por %p211, %p212
      %p215 = scmp.ne.s32.totalorder %s198, %s214
      %p216 = scmp.eq.s32.totalorder %s22, 0
      %p217 = por %p215, %p216
      %s218 = ssub.s32 %s23, %s35
      %p219 = scmp.eq.s32.totalorder %s218, 0
      %s221 = sadd.s32 %s220, 1
      %s222 = scalar_select %p219, %s220, %s221
      %p225 = pneg %p219
      %p226 = scmp.eq.s32.totalorder %s16, 3
      %p227 = por %p225, %p226
      %p228 = scmp.ne.s32.totalorder %s220, %s223
      %p229 = scmp.eq.s32.totalorder %s16, 0
      %p230 = por %p228, %p229
      %p231 = scmp.ne.s32.totalorder %s220, %s223
      %p232 = scmp.eq.s32.totalorder %s21, 3
      %p233 = por %p231, %p232
      %p234 = scmp.ne.s32.totalorder %s223, %s224
      %p235 = scmp.eq.s32.totalorder %s21, 0
      %p236 = por %p234, %p235
      %p237 = scmp.ne.s32.totalorder %s223, %s224
      %p238 = scmp.eq.s32.totalorder %s22, 3
      %p239 = por %p237, %p238
      %p241 = scmp.ne.s32.totalorder %s224, %s240
      %p242 = scmp.eq.s32.totalorder %s22, 0
      %p243 = por %p241, %p242
      %p244 = scmp.le.s32.totalorder 1, %s16
      %p245 = scmp.lt.s32.totalorder %s16, 5
      %p246 = pnand %p244, %p245
      %p247 = pneg %p246
      // Predicated region
      $region9: #{tpu_custom_call.1} parent=5 // pred_check
        _
      $region10: #{tpu_custom_call.1} parent=5 // pred_check_branch
        %249 = sbr.rel (%p246) target = $region12
      $region11: #{tpu_custom_call.1} parent=5 // pred_region
        %s250 = ssub.s32 %s16, 1
      $region12: #{tpu_custom_call.1} parent=5 // pred_fallthru
        _
      %p251 = scmp.lt.s32.totalorder %s16, 4
      // Predicated region
      $region13: #{tpu_custom_call.1} parent=5 // pred_check
        %p252 = pneg %p251
      $region14: #{tpu_custom_call.1} parent=5 // pred_check_branch
        %254 = sbr.rel (%p252) target = $region16
      $region15: #{tpu_custom_call.1} parent=5 // pred_region
        // Predicated region
        $region17: #{tpu_custom_call.1} parent=15 // pred_check
          %p255 = pneg %p48
        $region18: #{tpu_custom_call.1} parent=15 // pred_check_branch
          %257 = sbr.rel (%p255) target = $region20
        $region19: #{tpu_custom_call.1} parent=15 // pred_region
          %p258 = scmp.lt.s32.totalorder %s23, 1
          %s259 = scalar_select %p258, %s23, 1
          %s260 = smul.addr %s259, 8
          %s261 = scalar_lea.vmem %s0, %s260
        $region20: #{tpu_custom_call.1} parent=15 // pred_fallthru
          _
        // Predicated region
        $region21: #{tpu_custom_call.1} parent=15 // pred_check
          %p262 = pneg %p74
        $region22: #{tpu_custom_call.1} parent=15 // pred_check_branch
          %264 = sbr.rel (%p262) target = $region24
        $region23: #{tpu_custom_call.1} parent=15 // pred_region
          %p265 = scmp.lt.s32.totalorder %s23, 1
          %s266 = scalar_select %p265, %s23, 1
          %s267 = scalar_lea.vmem %s1, %s266
        $region24: #{tpu_custom_call.1} parent=15 // pred_fallthru
          _
        // Predicated region
        $region25: #{tpu_custom_call.1} parent=15 // pred_check
          %p268 = pneg %p100
        $region26: #{tpu_custom_call.1} parent=15 // pred_check_branch
          %270 = sbr.rel (%p268) target = $region28
        $region27: #{tpu_custom_call.1} parent=15 // pred_region
          %p271 = scmp.lt.s32.totalorder %s24, 1
          %s272 = scalar_select %p271, %s24, 1
          %s273 = smul.addr %s272, 4
          %s274 = smul.addr %s273, 4
          %s275 = scalar_lea.vmem %s2, %s274
        $region28: #{tpu_custom_call.1} parent=15 // pred_fallthru
          _
        // Predicated region
        $region29: #{tpu_custom_call.1} parent=15 // pred_check
          %p276 = pneg %p126
        $region30: #{tpu_custom_call.1} parent=15 // pred_check_branch
          %278 = sbr.rel (%p276) target = $region32
        $region31: #{tpu_custom_call.1} parent=15 // pred_region
          %p279 = scmp.lt.s32.totalorder %s24, 1
          %s280 = scalar_select %p279, %s24, 1
          %s281 = smul.addr %s280, 4
          %s282 = smul.addr %s281, 4
          %s283 = scalar_lea.vmem %s3, %s282
        $region32: #{tpu_custom_call.1} parent=15 // pred_fallthru
          _
        // Predicated region
        $region33: #{tpu_custom_call.1} parent=15 // pred_check
          %p284 = pneg %p152
        $region34: #{tpu_custom_call.1} parent=15 // pred_check_branch
          %286 = sbr.rel (%p284) target = $region36
        $region35: #{tpu_custom_call.1} parent=15 // pred_region
          %p287 = scmp.lt.s32.totalorder %s24, 1
          %s288 = scalar_select %p287, %s24, 1
          %s289 = smul.addr %s288, 4
          %s290 = smul.addr %s289, 4
          %s291 = scalar_lea.vmem %s4, %s290
        $region36: #{tpu_custom_call.1} parent=15 // pred_fallthru
          _
        // Predicated region
        $region37: #{tpu_custom_call.1} parent=15 // pred_check
          %p292 = pneg %p178
        $region38: #{tpu_custom_call.1} parent=15 // pred_check_branch
          %294 = sbr.rel (%p292) target = $region40
        $region39: #{tpu_custom_call.1} parent=15 // pred_region
          %p295 = scmp.lt.s32.totalorder %s24, 1
          %s296 = scalar_select %p295, %s24, 1
          %s297 = smul.addr %s296, 16
          %s298 = smul.addr %s297, 4
          %s299 = scalar_lea.vmem %s5, %s298
        $region40: #{tpu_custom_call.1} parent=15 // pred_fallthru
          _
        // Predicated region
        $region41: #{tpu_custom_call.1} parent=15 // pred_check
          %p300 = pneg %p204
        $region42: #{tpu_custom_call.1} parent=15 // pred_check_branch
          %302 = sbr.rel (%p300) target = $region44
        $region43: #{tpu_custom_call.1} parent=15 // pred_region
          %p303 = scmp.lt.s32.totalorder %s24, 1
          %s304 = scalar_select %p303, %s24, 1
          %s305 = smul.addr %s304, 8
          %s306 = scalar_lea.vmem %s6, %s305
        $region44: #{tpu_custom_call.1} parent=15 // pred_fallthru
          _
      $region16: #{tpu_custom_call.1} parent=5 // pred_fallthru
        _
      %p307 = scmp.le.s32.totalorder 1, %s16
      %p308 = scmp.lt.s32.totalorder %s16, 5
      %p309 = pnand %p307, %p308
      %p310 = pneg %p309
      // Predicated region
      $region45: #{tpu_custom_call.1} parent=5 // pred_check
        _
      $region46: #{tpu_custom_call.1} parent=5 // pred_check_branch
        %312 = sbr.rel (%p309) target = $region48
      $region47: #{tpu_custom_call.1} parent=5 // pred_region
        %s313 = ssub.s32 %s16, 1
        %p314 = scmp.lt.s32.totalorder %s25, 1
        %s315 = scalar_select %p314, %s25, 1
        %s316 = smul.addr %s315, 8
        %s317 = scalar_lea.vmem %s0, %s316
        %p318 = pneg %p54
        %p319 = pneg %p51
        %p320 = scmp.lt.s32.totalorder %s25, 1
        %s321 = scalar_select %p320, %s25, 1
        %s322 = scalar_lea.vmem %s1, %s321
        %p323 = pneg %p80
        %p324 = pneg %p77
        %p325 = scmp.lt.s32.totalorder %s26, 1
        %s326 = scalar_select %p325, %s26, 1
        %s327 = smul.addr %s326, 4
        %s328 = smul.addr %s327, 4
        %s329 = scalar_lea.vmem %s2, %s328
        %p330 = pneg %p106
        %p331 = pneg %p103
        %p332 = scmp.lt.s32.totalorder %s26, 1
        %s333 = scalar_select %p332, %s26, 1
        %s334 = smul.addr %s333, 4
        %s335 = smul.addr %s334, 4
        %s336 = scalar_lea.vmem %s3, %s335
        %p337 = pneg %p132
        %p338 = pneg %p129
        %p339 = scmp.lt.s32.totalorder %s26, 1
        %s340 = scalar_select %p339, %s26, 1
        %s341 = smul.addr %s340, 4
        %s342 = smul.addr %s341, 4
        %s343 = scalar_lea.vmem %s4, %s342
        %p344 = pneg %p158
        %p345 = pneg %p155
        %p346 = scmp.lt.s32.totalorder %s26, 1
        %s347 = scalar_select %p346, %s26, 1
        %s348 = smul.addr %s347, 16
        %s349 = smul.addr %s348, 4
        %s350 = scalar_lea.vmem %s5, %s349
        %p351 = pneg %p184
        %p352 = pneg %p181
        %p353 = scmp.lt.s32.totalorder %s26, 1
        %s354 = scalar_select %p353, %s26, 1
        %s355 = smul.addr %s354, 8
        %s356 = scalar_lea.vmem %s6, %s355
        %p357 = pneg %p210
        %p358 = pneg %p207
        %p359 = pneg %p236
        %p360 = pneg %p233
        %s361 = sand.u32 %s223, 1
        %s362 = scalar_lea.sflag [#allocation3], %s361
        %s363 = sand.u32 %s223, 1
        %s364 = smul.addr %s363, 8
        %s365 = scalar_lea.vmem [#allocation2], %s364
        %p366 = scmp.lt.s32.totalorder %s25, 1
        %s367 = scalar_select %p366, %s25, 1
        %s368 = smul.addr %s367, 8
        %s369 = scalar_lea.vmem %s0, %s368
        %p370 = scmp.lt.s32.totalorder %s25, 1
        %s371 = scalar_select %p370, %s25, 1
        %s372 = scalar_lea.vmem %s1, %s371
        %p373 = scmp.lt.s32.totalorder %s26, 1
        %s374 = scalar_select %p373, %s26, 1
        %s375 = smul.addr %s374, 4
        %s376 = smul.addr %s375, 4
        %s377 = scalar_lea.vmem %s2, %s376
        %p378 = scmp.lt.s32.totalorder %s26, 1
        %s379 = scalar_select %p378, %s26, 1
        %s380 = smul.addr %s379, 4
        %s381 = smul.addr %s380, 4
        %s382 = scalar_lea.vmem %s3, %s381
        %p383 = scmp.lt.s32.totalorder %s26, 1
        %s384 = scalar_select %p383, %s26, 1
        %s385 = smul.addr %s384, 4
        %s386 = smul.addr %s385, 4
        %s387 = scalar_lea.vmem %s4, %s386
        %p388 = scmp.lt.s32.totalorder %s26, 1
        %s389 = scalar_select %p388, %s26, 1
        %s390 = smul.addr %s389, 16
        %s391 = smul.addr %s390, 4
        %s392 = scalar_lea.vmem %s5, %s391
        %p393 = scmp.lt.s32.totalorder %s26, 1
        %s394 = scalar_select %p393, %s26, 1
        %s395 = smul.addr %s394, 8
        %s396 = scalar_lea.vmem %s6, %s395
        %p398 = scmp.eq.s32.totalorder %s26, 0
        // Predicated region
        $region49: #{tpu_custom_call.1} parent=47 // pred_check
          %p399 = pneg %p398
        $region50: #{tpu_custom_call.1} parent=47 // pred_check_branch
          %401 = sbr.rel (%p399) target = $region52
        $region51: #{tpu_custom_call.1} parent=47 // pred_region
          %v402 = vld [vmem:[%s369] sm:$0xff]
          %vm403 = vcmask 261120
          %404 = vst.msk [vmem:[%s365] sm:$0xff] %vm403, %v402
        $region52: #{tpu_custom_call.1} parent=47 // pred_fallthru
          _
        %v405 = vld [vmem:[%s365] sm:$0xff]
        %v406 = vld [vmem:[%s396] sm:$0xff]
        %v407 = vpack.c.bf16 %v405, %v405
        %v408 = vld [vmem:[%s377] sm:$0xf]
        %v409 = vld [vmem:[%s377 + $0x4] sm:$0xf]
        %v410 = vld [vmem:[%s377 + $0x8] sm:$0xf]
        %v411 = vld [vmem:[%s377 + $0xc] sm:$0xf]
        %v412 = vperm.slane %v406, 7
        %v417 = vunpack.c.l.b16 %v408
        %v418 = vunpack.c.l.b16 %v409
        %v419 = vunpack.c.l.b16 %v410
        %v420 = vunpack.c.l.b16 %v411
        %v421 = vpack.c.b16 %v418, %v417
        %v422 = vpack.c.b16 %v420, %v419
        %vm425 = vcmask 261120
        %v427 = vsel %vm425, %v407, 0
        %429 = vmatpush.bf16.msra.mxu0 0
        %430 = vmatpush.bf16.msra.mxu0 0
        %431 = vmatpush.bf16.msra.mxu0 0
        %432 = vmatpush.bf16.msra.mxu0 0
        %433 = vmatpush.bf16.msra.mxu0 0
        %434 = vmatpush.bf16.msra.mxu0 0
        %435 = vmatpush.bf16.msra.mxu0 %v422
        %436 = vmatpush.bf16.msra.mxu0 %v421
        %437 = vmatmul.bf16.gmra.mxu0 %v427
        %v438 = vpop.f32.mrf.mxu0
        %v439 = vadd.f32 %v412, %v438
        %v440 = vpop.f32.mrf.mxu0
        %441 = vdwg.mxu0
        %v442 = vpack.c.bf16 %v439, %v439
        %444 = vrot.lane.b32.xlu0 %v442, 120
        %v445 = vpop.permute.xlu0 %444
        %446 = vrot.lane.b32.xlu0 %v442, 112
        %v447 = vpop.permute.xlu0 %446
        %448 = vrot.lane.b32.xlu0 %v442, 104
        %v449 = vpop.permute.xlu0 %448
        %v450 = vld [vmem:[%s372] sm:$0x1]
        %v451 = vsub.f32 %v450, 1.0
        %v452 = vmul.f32 %v451, 1e+09
        %v454 = vperm.slane %v452, 0
        %v456 = vunpack.c.l.b16 %v442
        %v457 = vpack.c.b16 %v456, %v456
        %458 = vrot.lane.b32.xlu0 %v457, 96
        %v459 = vpop.permute.xlu0 %458
        %vm460 = vcmask 64512
        %v462 = vsel %vm460, %v442, 0
        %v465 = vsel %vm460, %v459, 0
        %467 = vmatpush.bf16.xpose.msra.mxu0 0
        %468 = vmatpush.bf16.xpose.msra.mxu0 0
        %469 = vmatpush.bf16.xpose.msra.mxu0 0
        %470 = vmatpush.bf16.xpose.msra.mxu0 0
        %471 = vmatpush.bf16.xpose.msra.mxu0 0
        %472 = vmatpush.bf16.xpose.msra.mxu0 0
        %473 = vmatpush.bf16.xpose.msra.mxu0 0
        %474 = vmatpush.bf16.xpose.msra.mxu0 %v465
        %475 = vmatmul.bf16.gmra.mxu0 %v462
        %v476 = vpop.f32.mrf.mxu0
        %v477 = vadd.f32 %v454, %v476
        %v478 = vpop.f32.mrf.mxu0
        %479 = vdwg.mxu0
        %v480 = vunpack.c.l.b16 %v445
        %v481 = vpack.c.b16 %v480, %v480
        %482 = vrot.lane.b32.xlu0 %v481, 96
        %v483 = vpop.permute.xlu0 %482
        %v485 = vsel %vm460, %v445, 0
        %v488 = vsel %vm460, %v483, 0
        %490 = vmatpush.bf16.xpose.msra.mxu0 0
        %491 = vmatpush.bf16.xpose.msra.mxu0 0
        %492 = vmatpush.bf16.xpose.msra.mxu0 0
        %493 = vmatpush.bf16.xpose.msra.mxu0 0
        %494 = vmatpush.bf16.xpose.msra.mxu0 0
        %495 = vmatpush.bf16.xpose.msra.mxu0 0
        %496 = vmatpush.bf16.xpose.msra.mxu0 0
        %497 = vmatpush.bf16.xpose.msra.mxu0 %v488
        %498 = vmatmul.bf16.gmra.mxu0 %v485
        %v499 = vpop.f32.mrf.mxu0
        %v500 = vadd.f32 %v454, %v499
        %v501 = vpop.f32.mrf.mxu0
        %502 = vdwg.mxu0
        %v503 = vunpack.c.l.b16 %v447
        %v504 = vpack.c.b16 %v503, %v503
        %505 = vrot.lane.b32.xlu0 %v504, 96
        %v506 = vpop.permute.xlu0 %505
        %v508 = vsel %vm460, %v447, 0
        %v511 = vsel %vm460, %v506, 0
        %513 = vmatpush.bf16.xpose.msra.mxu0 0
        %514 = vmatpush.bf16.xpose.msra.mxu0 0
        %515 = vmatpush.bf16.xpose.msra.mxu0 0
        %516 = vmatpush.bf16.xpose.msra.mxu0 0
        %517 = vmatpush.bf16.xpose.msra.mxu0 0
        %518 = vmatpush.bf16.xpose.msra.mxu0 0
        %519 = vmatpush.bf16.xpose.msra.mxu0 0
        %520 = vmatpush.bf16.xpose.msra.mxu0 %v511
        %521 = vmatmul.bf16.gmra.mxu0 %v508
        %v522 = vpop.f32.mrf.mxu0
        %v523 = vadd.f32 %v454, %v522
        %v524 = vpop.f32.mrf.mxu0
        %525 = vdwg.mxu0
        %v526 = vunpack.c.l.b16 %v449
        %v527 = vpack.c.b16 %v526, %v526
        %528 = vrot.lane.b32.xlu0 %v527, 96
        %v529 = vpop.permute.xlu0 %528
        %v531 = vsel %vm460, %v449, 0
        %v534 = vsel %vm460, %v529, 0
        %536 = vmatpush.bf16.xpose.msra.mxu0 0
        %537 = vmatpush.bf16.xpose.msra.mxu0 0
        %538 = vmatpush.bf16.xpose.msra.mxu0 0
        %539 = vmatpush.bf16.xpose.msra.mxu0 0
        %540 = vmatpush.bf16.xpose.msra.mxu0 0
        %541 = vmatpush.bf16.xpose.msra.mxu0 0
        %542 = vmatpush.bf16.xpose.msra.mxu0 0
        %543 = vmatpush.bf16.xpose.msra.mxu0 %v534
        %544 = vmatmul.bf16.gmra.mxu0 %v531
        %v545 = vpop.f32.mrf.mxu0
        %v546 = vadd.f32 %v454, %v545
        %v547 = vpop.f32.mrf.mxu0
        %548 = vdwg.mxu0
        %v549 = vsel %vm460, %v477, -inf
        %550 = vmax.xlane.f32.xlu0 %v549
        %v551 = vpop.xlane.xlu0 %550
        %v552 = vsel %vm460, %v500, -inf
        %553 = vmax.xlane.f32.xlu0 %v552
        %v554 = vpop.xlane.xlu0 %553
        %v555 = vsel %vm460, %v523, -inf
        %556 = vmax.xlane.f32.xlu0 %v555
        %v557 = vpop.xlane.xlu0 %556
        %v558 = vsel %vm460, %v546, -inf
        %559 = vmax.xlane.f32.xlu0 %v558
        %v560 = vpop.xlane.xlu0 %559
        %v561 = vsub.f32 %v477, %v551
        %v562 = vsub.f32 %v500, %v554
        %v563 = vsub.f32 %v523, %v557
        %v564 = vsub.f32 %v546, %v560
        %v565 = vmul.f32 %v561, 1.442695
        %v566 = vpow.pop %v565
        %v567 = vmul.f32 %v562, 1.442695
        %v568 = vpow.pop %v567
        %v569 = vmul.f32 %v563, 1.442695
        %v570 = vpow.pop %v569
        %v571 = vmul.f32 %v564, 1.442695
        %v572 = vpow.pop %v571
        %v573 = vsel %vm460, %v566, 0.0
        %574 = vadd.xlane.f32.xlu0 %v573
        %v575 = vpop.xlane.xlu0 %574
        %v576 = vsel %vm460, %v568, 0.0
        %577 = vadd.xlane.f32.xlu0 %v576
        %v578 = vpop.xlane.xlu0 %577
        %v579 = vsel %vm460, %v570, 0.0
        %580 = vadd.xlane.f32.xlu0 %v579
        %v581 = vpop.xlane.xlu0 %580
        %v582 = vsel %vm460, %v572, 0.0
        %583 = vadd.xlane.f32.xlu0 %v582
        %v584 = vpop.xlane.xlu0 %583
        %v585 = vpack.c.bf16 %v566, %v566
        %v586 = vpack.c.bf16 %v568, %v568
        %v587 = vpack.c.bf16 %v570, %v570
        %v588 = vpack.c.bf16 %v572, %v572
        %589 = vrot.lane.b32.xlu0 %v457, 64
        %v590 = vpop.permute.xlu0 %589
        %v592 = vsel %vm460, %v585, 0
        %vm594 = vcmask 1043456
        %v596 = vsel %vm594, %v590, 0
        %598 = vmatpush.bf16.msra.mxu0 0
        %599 = vmatpush.bf16.msra.mxu0 0
        %600 = vmatpush.bf16.msra.mxu0 0
        %601 = vmatpush.bf16.msra.mxu0 0
        %602 = vmatpush.bf16.msra.mxu0 0
        %603 = vmatpush.bf16.msra.mxu0 0
        %604 = vmatpush.bf16.msra.mxu0 0
        %605 = vmatpush.bf16.msra.mxu0 %v596
        %606 = vmatmul.bf16.gmra.mxu0 %v592
        %v607 = vpop.f32.mrf.mxu0
        %v608 = vadd.f32 0.0, %v607
        %v609 = vpop.f32.mrf.mxu0
        %610 = vdwg.mxu0
        %611 = vrot.lane.b32.xlu0 %v481, 64
        %v612 = vpop.permute.xlu0 %611
        %v614 = vsel %vm460, %v586, 0
        %v617 = vsel %vm594, %v612, 0
        %619 = vmatpush.bf16.msra.mxu0 0
        %620 = vmatpush.bf16.msra.mxu0 0
        %621 = vmatpush.bf16.msra.mxu0 0
        %622 = vmatpush.bf16.msra.mxu0 0
        %623 = vmatpush.bf16.msra.mxu0 0
        %624 = vmatpush.bf16.msra.mxu0 0
        %625 = vmatpush.bf16.msra.mxu0 0
        %626 = vmatpush.bf16.msra.mxu0 %v617
        %627 = vmatmul.bf16.gmra.mxu0 %v614
        %v628 = vpop.f32.mrf.mxu0
        %v629 = vadd.f32 0.0, %v628
        %v630 = vpop.f32.mrf.mxu0
        %631 = vdwg.mxu0
        %632 = vrot.lane.b32.xlu0 %v504, 64
        %v633 = vpop.permute.xlu0 %632
        %v635 = vsel %vm460, %v587, 0
        %v638 = vsel %vm594, %v633, 0
        %640 = vmatpush.bf16.msra.mxu0 0
        %641 = vmatpush.bf16.msra.mxu0 0
        %642 = vmatpush.bf16.msra.mxu0 0
        %643 = vmatpush.bf16.msra.mxu0 0
        %644 = vmatpush.bf16.msra.mxu0 0
        %645 = vmatpush.bf16.msra.mxu0 0
        %646 = vmatpush.bf16.msra.mxu0 0
        %647 = vmatpush.bf16.msra.mxu0 %v638
        %648 = vmatmul.bf16.gmra.mxu0 %v635
        %v649 = vpop.f32.mrf.mxu0
        %v650 = vadd.f32 0.0, %v649
        %v651 = vpop.f32.mrf.mxu0
        %652 = vdwg.mxu0
        %653 = vrot.lane.b32.xlu0 %v527, 64
        %v654 = vpop.permute.xlu0 %653
        %v656 = vsel %vm460, %v588, 0
        %v659 = vsel %vm594, %v654, 0
        %661 = vmatpush.bf16.msra.mxu0 0
        %662 = vmatpush.bf16.msra.mxu0 0
        %663 = vmatpush.bf16.msra.mxu0 0
        %664 = vmatpush.bf16.msra.mxu0 0
        %665 = vmatpush.bf16.msra.mxu0 0
        %666 = vmatpush.bf16.msra.mxu0 0
        %667 = vmatpush.bf16.msra.mxu0 0
        %668 = vmatpush.bf16.msra.mxu0 %v659
        %669 = vmatmul.bf16.gmra.mxu0 %v656
        %v670 = vpop.f32.mrf.mxu0
        %v671 = vadd.f32 0.0, %v670
        %v672 = vpop.f32.mrf.mxu0
        %673 = vdwg.mxu0
        %v674 = vrcp.pop %v575
        %v675 = vrcp.pop %v578
        %v676 = vrcp.pop %v581
        %v677 = vrcp.pop %v584
        %v678 = vmul.f32 %v608, %v674
        %v679 = vmul.f32 %v629, %v675
        %v680 = vmul.f32 %v650, %v676
        %v681 = vmul.f32 %v671, %v677
        %683 = vrot.lane.b32.xlu0 %v679, 8
        %v684 = vpop.permute.xlu0 %683
        %687 = vrot.lane.b32.xlu0 %v680, 16
        %v688 = vpop.permute.xlu0 %687
        %691 = vrot.lane.b32.xlu0 %v681, 24
        %v692 = vpop.permute.xlu0 %691
        %v694 = vsel %vm460, %v678, %v684
        %vm695 = vcmask 130048
        %v696 = vsel %vm695, %v694, %v688
        %vm697 = vcmask 195584
        %v698 = vsel %vm697, %v696, %v692
        %v699 = vpack.c.bf16 %v698, %v698
        %v700 = vld [vmem:[%s382] sm:$0xf]
        %v701 = vld [vmem:[%s382 + $0x4] sm:$0xf]
        %v702 = vld [vmem:[%s382 + $0x8] sm:$0xf]
        %v703 = vld [vmem:[%s382 + $0xc] sm:$0xf]
        %v704 = vperm.slane %v406, 0
        %v709 = vunpack.c.l.b16 %v700
        %v710 = vunpack.c.l.b16 %v701
        %v711 = vunpack.c.l.b16 %v702
        %v712 = vunpack.c.l.b16 %v703
        %v713 = vpack.c.b16 %v710, %v709
        %v714 = vpack.c.b16 %v712, %v711
        %v718 = vsel %vm425, %v699, 0
        %720 = vmatpush.bf16.msra.mxu0 0
        %721 = vmatpush.bf16.msra.mxu0 0
        %722 = vmatpush.bf16.msra.mxu0 0
        %723 = vmatpush.bf16.msra.mxu0 0
        %724 = vmatpush.bf16.msra.mxu0 0
        %725 = vmatpush.bf16.msra.mxu0 0
        %726 = vmatpush.bf16.msra.mxu0 %v714
        %727 = vmatpush.bf16.msra.mxu0 %v713
        %728 = vmatmul.bf16.gmra.mxu0 %v718
        %v729 = vpop.f32.mrf.mxu0
        %v730 = vadd.f32 %v704, %v729
        %v731 = vpop.f32.mrf.mxu0
        %732 = vdwg.mxu0
        %v733 = vadd.f32 %v405, %v730
        %v734 = vsel %vm425, %v733, 0.0
        %735 = vadd.xlane.f32.xlu0 %v734
        %v736 = vpop.xlane.xlu0 %735
        %v737 = vmul.f32 %v733, %v733
        %v738 = vsel %vm425, %v737, 0.0
        %739 = vadd.xlane.f32.xlu0 %v738
        %v740 = vpop.xlane.xlu0 %739
        %v741 = vmul.f32 %v736, 0.03125
        %v742 = vmul.f32 %v740, 0.03125
        %v743 = vmul.f32 %v741, %v741
        %v744 = vsub.f32 %v742, %v743
        %v745 = vmax.f32 %v744, 0.0
        %v746 = vsub.f32 %v733, %v741
        %v747 = vadd.f32 %v745, 1e-05
        %v748 = vrsqrt.pop %v747
        %v749 = vmul.f32 %v748, %v747
        %v750 = vmul.f32 %v749, %v748
        %v751 = vmul.f32 0.5, %v750
        %v752 = vsub.f32 1.5, %v751
        %v753 = vmul.f32 %v748, %v752
        %vm754 = vweird.f32 %v747
        %vm755 = vweird.f32 %v748
        %vm756 = vmor %vm754, %vm755
        %v757 = vsel %vm756, %v748, %v753
        %v758 = vmul.f32 %v746, %v757
        %v759 = vperm.slane %v406, 2
        %v760 = vmul.f32 %v758, %v759
        %v761 = vperm.slane %v406, 3
        %v762 = vadd.f32 %v760, %v761
        %v763 = vpack.c.bf16 %v762, %v762
        %v764 = vld [vmem:[%s387] sm:$0xf]
        %v765 = vld [vmem:[%s387 + $0x4] sm:$0xf]
        %v766 = vld [vmem:[%s387 + $0x8] sm:$0xf]
        %v767 = vld [vmem:[%s387 + $0xc] sm:$0xf]
        %v768 = vperm.slane %v406, 6
        %v773 = vunpack.c.l.b16 %v764
        %v774 = vunpack.c.l.b16 %v765
        %v775 = vunpack.c.l.b16 %v766
        %v776 = vunpack.c.l.b16 %v767
        %v777 = vpack.c.b16 %v774, %v773
        %v778 = vpack.c.b16 %v776, %v775
        %v782 = vsel %vm425, %v763, 0
        %784 = vmatpush.bf16.msra.mxu0 0
        %785 = vmatpush.bf16.msra.mxu0 0
        %786 = vmatpush.bf16.msra.mxu0 0
        %787 = vmatpush.bf16.msra.mxu0 0
        %788 = vmatpush.bf16.msra.mxu0 0
        %789 = vmatpush.bf16.msra.mxu0 0
        %790 = vmatpush.bf16.msra.mxu0 %v778
        %791 = vmatpush.bf16.msra.mxu0 %v777
        %792 = vmatmul.bf16.gmra.mxu0 %v782
        %v793 = vpop.f32.mrf.mxu0
        %v794 = vadd.f32 %v768, %v793
        %v795 = vpop.f32.mrf.mxu0
        %796 = vdwg.mxu0
        %v797 = vmax.f32 %v794, 0.0
        %v798 = vpack.c.bf16 %v797, %v797
        %v799 = vld [vmem:[%s392] sm:$0xf]
        %v800 = vld [vmem:[%s392 + $0x4] sm:$0xf]
        %v801 = vld [vmem:[%s392 + $0x8] sm:$0xf]
        %v802 = vld [vmem:[%s392 + $0xc] sm:$0xf]
        %v803 = vld [vmem:[%s392 + $0x10] sm:$0xf]
        %v804 = vld [vmem:[%s392 + $0x14] sm:$0xf]
        %v805 = vld [vmem:[%s392 + $0x18] sm:$0xf]
        %v806 = vld [vmem:[%s392 + $0x1c] sm:$0xf]
        %v807 = vld [vmem:[%s392 + $0x20] sm:$0xf]
        %v808 = vld [vmem:[%s392 + $0x24] sm:$0xf]
        %v809 = vld [vmem:[%s392 + $0x28] sm:$0xf]
        %v810 = vld [vmem:[%s392 + $0x2c] sm:$0xf]
        %v811 = vld [vmem:[%s392 + $0x30] sm:$0xf]
        %v812 = vld [vmem:[%s392 + $0x34] sm:$0xf]
        %v813 = vld [vmem:[%s392 + $0x38] sm:$0xf]
        %v814 = vld [vmem:[%s392 + $0x3c] sm:$0xf]
        %v815 = vperm.slane %v406, 1
        %v832 = vunpack.c.l.b16 %v799
        %v833 = vunpack.c.l.b16 %v800
        %v834 = vunpack.c.l.b16 %v801
        %v835 = vunpack.c.l.b16 %v802
        %v836 = vunpack.c.l.b16 %v803
        %v837 = vunpack.c.l.b16 %v804
        %v838 = vunpack.c.l.b16 %v805
        %v839 = vunpack.c.l.b16 %v806
        %v840 = vunpack.c.l.b16 %v807
        %v841 = vunpack.c.l.b16 %v808
        %v842 = vunpack.c.l.b16 %v809
        %v843 = vunpack.c.l.b16 %v810
        %v844 = vunpack.c.l.b16 %v811
        %v845 = vunpack.c.l.b16 %v812
        %v846 = vunpack.c.l.b16 %v813
        %v847 = vunpack.c.l.b16 %v814
        %v848 = vpack.c.b16 %v833, %v832
        %v849 = vpack.c.b16 %v835, %v834
        %v850 = vpack.c.b16 %v837, %v836
        %v851 = vpack.c.b16 %v839, %v838
        %v852 = vpack.c.b16 %v841, %v840
        %v853 = vpack.c.b16 %v843, %v842
        %v854 = vpack.c.b16 %v845, %v844
        %v855 = vpack.c.b16 %v847, %v846
        %864 = vmatpush.bf16.msra.mxu0 %v855
        %865 = vmatpush.bf16.msra.mxu0 %v854
        %866 = vmatpush.bf16.msra.mxu0 %v853
        %867 = vmatpush.bf16.msra.mxu0 %v852
        %868 = vmatpush.bf16.msra.mxu0 %v851
        %869 = vmatpush.bf16.msra.mxu0 %v850
        %870 = vmatpush.bf16.msra.mxu0 %v849
        %871 = vmatpush.bf16.msra.mxu0 %v848
        %872 = vmatmul.bf16.gmra.mxu0 %v798
        %v873 = vpop.f32.mrf.mxu0
        %v874 = vadd.f32 %v815, %v873
        %v875 = vpop.f32.mrf.mxu0
        %876 = vdwg.mxu0
        %v877 = vadd.f32 %v874, %v405
        %v878 = vsel %vm425, %v877, 0.0
        %879 = vadd.xlane.f32.xlu0 %v878
        %v880 = vpop.xlane.xlu0 %879
        %v881 = vmul.f32 %v877, %v877
        %v882 = vsel %vm425, %v881, 0.0
        %883 = vadd.xlane.f32.xlu0 %v882
        %v884 = vpop.xlane.xlu0 %883
        %v885 = vmul.f32 %v880, 0.03125
        %v886 = vmul.f32 %v884, 0.03125
        %v887 = vmul.f32 %v885, %v885
        %v888 = vsub.f32 %v886, %v887
        %v889 = vmax.f32 %v888, 0.0
        %v890 = vsub.f32 %v877, %v885
        %v891 = vadd.f32 %v889, 1e-05
        %v892 = vrsqrt.pop %v891
        %v893 = vmul.f32 %v892, %v891
        %v894 = vmul.f32 %v893, %v892
        %v895 = vmul.f32 0.5, %v894
        %v896 = vsub.f32 1.5, %v895
        %v897 = vmul.f32 %v892, %v896
        %vm898 = vweird.f32 %v891
        %vm899 = vweird.f32 %v892
        %vm900 = vmor %vm898, %vm899
        %v901 = vsel %vm900, %v892, %v897
        %v902 = vmul.f32 %v890, %v901
        %v903 = vperm.slane %v406, 4
        %v904 = vmul.f32 %v902, %v903
        %v905 = vperm.slane %v406, 5
        %v906 = vadd.f32 %v904, %v905
        %907 = vst.msk [vmem:[%s365] sm:$0xff] %vm425, %v906
        %s908 = sand.u32 %s223, 1
        %s909 = scalar_lea.sflag [#allocation3], %s908
        %s910 = sand.u32 %s223, 1
        %s911 = smul.addr %s910, 8
        %s912 = scalar_lea.vmem [#allocation2], %s911
        // Predicated region
        $region53: #{tpu_custom_call.1} parent=47 // pred_check
          %p913 = pneg %p233
        $region54: #{tpu_custom_call.1} parent=47 // pred_check_branch
          %915 = sbr.rel (%p913) target = $region56
        $region55: #{tpu_custom_call.1} parent=47 // pred_region
          %917 = vsyncadd %s909, 0
          %s918 = smul.addr %s25, 8
          %s919 = scalar_lea.hbm %s7, %s918
          %s921 = sshll.u32 %s912, 4
          %s922 = int_to_ptr.vmem [resolvable:$true] %s921
          %s923 = sshll.u32 %s919, 4
          %s924 = int_to_ptr.hbm [resolvable:$true] %s923
          %926 = dma.vmem_to_hbm [thread:$0]  %s922, 128, %s924, %s909
        $region56: #{tpu_custom_call.1} parent=47 // pred_fallthru
          _
      $region48: #{tpu_custom_call.1} parent=5 // pred_fallthru
        _
      %p927 = scmp.le.s32.totalorder 2, %s16
      // Predicated region
      $region57: #{tpu_custom_call.1} parent=5 // pred_check
        %p928 = pneg %p927
      $region58: #{tpu_custom_call.1} parent=5 // pred_check_branch
        %930 = sbr.rel (%p928) target = $region60
      $region59: #{tpu_custom_call.1} parent=5 // pred_region
        %s931 = ssub.s32 %s16, 2
        // Predicated region
        $region61: #{tpu_custom_call.1} parent=59 // pred_check
          %p932 = pneg %p239
        $region62: #{tpu_custom_call.1} parent=59 // pred_check_branch
          %934 = sbr.rel (%p932) target = $region64
        $region63: #{tpu_custom_call.1} parent=59 // pred_region
          %s935 = sand.u32 %s224, 1
          %s936 = scalar_lea.sflag [#allocation3], %s935
          %s937 = sand.u32 %s224, 1
          %s938 = smul.addr %s937, 8
          %s939 = scalar_lea.vmem [#allocation2], %s938
          %941 = dma.done %s936, 128
        $region64: #{tpu_custom_call.1} parent=59 // pred_fallthru
          _
      $region60: #{tpu_custom_call.1} parent=5 // pred_fallthru
        _
    $region6: #{tpu_custom_call.1} parent=1 // loop_footer
      %s20 = sadd.s32 1, %s16
    $region7: #{tpu_custom_call.1} parent=1 // loop_footer_branch
      %15 = sbr.rel target = $region3
    $region8: #{tpu_custom_call.1} parent=1 // loop_exit
      _
    %942 = vsyncpa [#allocation3], 1
    %s943 = scalar_lea.sflag [#allocation3], 1
    %944 = vsyncpa %s943, 1

</llo_original>
